<compile_context>
chip_gen: v5e
topology: v5e:2x2
jax: 0.10.0
libtpu: 0.0.40
codegen_flags: <defaults>
</compile_context>

<pallas_src>
import functools
import math

import jax
import jax.numpy as jnp
from jax.experimental import pallas as pl
from jax.experimental.pallas import tpu as pltpu

_LANE = 128     # vreg lane width
_SUBLANE = 8    # vreg sublane depth (f32)


def _round_up(x, m):
    return (x + m - 1) // m * m


def _fused_mlp_kernel(*refs, n_layers, n_k_steps):
    """Fused MLP forward.

    refs = (x_tile, w1_tile, b1, w2, b2, ..., wL, bL, out_tile, acc_scratch)
    Layer-1 partial products accumulate over grid axis 1 (K); on the last K
    step the remaining (small, VMEM-resident) layers are applied and the
    final logits tile is written.
    """
    x_ref = refs[0]
    wb = refs[1:1 + 2 * n_layers]
    w_refs = wb[0::2]
    b_refs = wb[1::2]
    o_ref = refs[1 + 2 * n_layers]
    acc_ref = refs[2 + 2 * n_layers]

    def tail(h):
        # h: f32 (tm, H1) layer-1 pre-activation (bias already included).
        h = jnp.maximum(h, 0.0)
        # TODO(synk): nn.Dropout(0.3) after each ReLU is identity in eval mode;
        # training-mode stochastic dropout is not implemented here.
        for i in range(1, n_layers):
            h = jnp.dot(h.astype(w_refs[i].dtype), w_refs[i][...],
                        preferred_element_type=jnp.float32) + b_refs[i][...]
            if i != n_layers - 1:
                h = jnp.maximum(h, 0.0)
        o_ref[...] = h.astype(o_ref.dtype)

    if n_k_steps == 1:
        # Single K step: no grid reduction -> skip the VMEM accumulator path.
        h = jnp.dot(x_ref[...], w_refs[0][...],
                    preferred_element_type=jnp.float32) + b_refs[0][...]
        tail(h)
    else:
        k = pl.program_id(1)

        @pl.when(k == 0)
        def _():
            # Initialize accumulator with the bias (broadcast over sublanes):
            # removes the epilogue bias add and any dependence on re-fetching b1.
            acc_ref[...] = jnp.broadcast_to(
                b_refs[0][...].astype(jnp.float32), acc_ref.shape)

        acc_ref[...] += jnp.dot(x_ref[...], w_refs[0][...],
                                preferred_element_type=jnp.float32)

        @pl.when(k == n_k_steps - 1)
        def _():
            tail(acc_ref[...])


def classifier_forward(x, params, in_features, *, compute_dtype=jnp.bfloat16,
                       tk_cap=1024, tm_cap=256):
    """Mirrors Classifier.forward (eval mode) with a single fused Pallas kernel."""
    x = x.reshape(-1, in_features)
    M, K = x.shape
    n_layers = len(params)
    num_classes = params[-1][1].shape[-1]

    # ---- tile sizes: lane/sublane dense; tk capped so double-buffered
    #      (x, W1) tiles fit comfortably in v7x's 64 MiB VMEM (v5e/v6e: 128 MiB).
    tk = min(_round_up(K, _LANE), tk_cap)
    K_pad = _round_up(K, tk)
    tm = min(_round_up(M, _SUBLANE), tm_cap)
    M_pad = _round_up(M, tm)
    n_m, n_k = M_pad // tm, K_pad // tk

    # ---- pad every layer width to a multiple of 128 lanes, cast matmul
    #      operands to bf16 for the MXU (f32 accumulation). Zero padding is
    #      exact: padded columns get zero weights + zero bias and stay zero
    #      through ReLU, and padded rows of the next weight are zero too.
    in_dims = [K_pad]
    padded = []
    for (w, b) in params:
        fan_in, fan_out = w.shape
        out_pad = _round_up(fan_out, _LANE)
        w_p = jnp.zeros((in_dims[-1], out_pad), compute_dtype)
        w_p = w_p.at[:fan_in, :fan_out].set(w.astype(compute_dtype))
        b_p = jnp.zeros((1, out_pad), jnp.float32).at[:, :fan_out].set(b)
        padded.append((w_p, b_p))
        in_dims.append(out_pad)
    h1_pad = in_dims[1]
    c_pad = in_dims[-1]

    x_p = jnp.zeros((M_pad, K_pad), compute_dtype)
    x_p = x_p.at[:M, :K].set(x.astype(compute_dtype))

    # ---- BlockSpecs: x and W1 stream over (m, k); everything else maps to the
    #      same block every step -> fetched once and kept resident in VMEM.
    in_specs = [pl.BlockSpec((tm, tk), lambda m, k: (m, k)),
                pl.BlockSpec((tk, h1_pad), lambda m, k: (k, 0)),
                pl.BlockSpec((1, h1_pad), lambda m, k: (0, 0))]
    for i in range(1, n_layers):
        d_in, d_out = in_dims[i], in_dims[i + 1]
        in_specs.append(pl.BlockSpec((d_in, d_out), lambda m, k: (0, 0)))
        in_specs.append(pl.BlockSpec((1, d_out), lambda m, k: (0, 0)))
    out_specs = pl.BlockSpec((tm, c_pad), lambda m, k: (m, 0))

    # ---- rough VMEM budget -> explicit limit (headroom-safe on v7x's 64 MiB).
    bpe = jnp.dtype(compute_dtype).itemsize
    resident = sum(int(w.size) * bpe + int(b.size) * 4 for w, b in padded[1:])
    est = (2 * (tm * tk + tk * h1_pad) * bpe   # double-buffered x / W1 tiles
           + h1_pad * 4                        # b1
           + resident                          # resident layer 2..L params
           + tm * h1_pad * 4                   # f32 accumulator
           + 2 * tm * c_pad * 4)               # double-buffered output tile
    vmem_limit = int(min(48 * 2 ** 20, max(32 * 2 ** 20, 2 * est)))

    kernel = functools.partial(_fused_mlp_kernel, n_layers=n_layers,
                               n_k_steps=n_k)
    flat_in = [x_p]
    for w_p, b_p in padded:
        flat_in += [w_p, b_p]

    out = pl.pallas_call(
        kernel,
        out_shape=jax.ShapeDtypeStruct((M_pad, c_pad), jnp.float32),
        grid_spec=pltpu.PrefetchScalarGridSpec(
            num_scalar_prefetch=0,
            grid=(n_m, n_k),
            in_specs=in_specs,
            out_specs=out_specs,
            scratch_shapes=[pltpu.VMEM((tm, h1_pad), jnp.float32)],
        ),
        compiler_params=pltpu.CompilerParams(
            # batch axis parallel (shards across v7x's 2 TCs), K is a reduction
            dimension_semantics=("parallel", "arbitrary"),
            vmem_limit_bytes=vmem_limit,
        ),
    )(*flat_in)

    # Slice away batch/lane padding.
    return out[:M, :num_classes]


def init_classifier_params(key, num_classes, in_features, hidden_dim, num_layers):
    """Deterministic init matching Classifier.__init__ layer shapes.

    PyTorch-Linear-style uniform(-1/sqrt(fan_in), 1/sqrt(fan_in)).
    Weights stored as (in_features, out_features).
    """
    dims = [(in_features, hidden_dim)]
    h = hidden_dim
    for _ in range(num_layers - 2):
        h = h // 2
        dims.append((h * 2, h))
    dims.append((h, num_classes))

    params = []
    for (fan_in, fan_out) in dims:
        key, kw, kb = jax.random.split(key, 3)
        bound = 1.0 / math.sqrt(fan_in)
        w = jax.random.uniform(kw, (fan_in, fan_out), jnp.float32, -bound, bound)
        b = jax.random.uniform(kb, (1, fan_out), jnp.float32, -bound, bound)
        params.append((w, b))
    return params


def classifier_forward_ref(x, params, in_features, compute_dtype=jnp.bfloat16):
    """Pure-JAX reference with the same bf16-operand / f32-accumulate math."""
    h = x.reshape(-1, in_features)
    n = len(params)
    for i, (w, b) in enumerate(params):
        h = jnp.dot(h.astype(compute_dtype), w.astype(compute_dtype),
                    preferred_element_type=jnp.float32) + b
        if i != n - 1:
            h = jnp.maximum(h, 0.0)
    return h


if __name__ == "__main__":
    # Small shapes consistent with the module (original: 196*768 -> 4096 -> ... -> 2).
    batch = 2
    seq, feat = 4, 128          # stand-in for (196, 768)
    in_features = seq * feat    # 512
    hidden_dim = 256
    num_layers = 4
    num_classes = 2

    key = jax.random.PRNGKey(0)
    k_x, k_p = jax.random.split(key)
    x = jax.random.normal(k_x, (batch, seq, feat), dtype=jnp.float32)
    params = init_classifier_params(
        k_p, num_classes, in_features, hidden_dim, num_layers
    )

    fwd = jax.jit(functools.partial(classifier_forward, in_features=in_features))
    logits = jax.block_until_ready(fwd(x, params))

    ref = classifier_forward_ref(x, params, in_features)
    assert logits.shape == (batch, num_classes), logits.shape
    max_err = float(jnp.max(jnp.abs(logits - ref)))
    assert jnp.allclose(logits, ref, atol=2e-3, rtol=2e-3), (
        f"mismatch vs reference, max abs err = {max_err}"
    )

    print("KERNEL_OK")
</pallas_src>

<mosaic_0001>
module attributes {stable_mosaic.version = 11 : i64} {
  func.func @_fused_mlp_kernel(%arg0: i32, %arg1: i32, %arg2: memref<8x512xbf16, #tpu.memory_space<vmem>>, %arg3: memref<512x256xbf16, #tpu.memory_space<vmem>>, %arg4: memref<1x256xf32, #tpu.memory_space<vmem>>, %arg5: memref<256x128xbf16, #tpu.memory_space<vmem>>, %arg6: memref<1x128xf32, #tpu.memory_space<vmem>>, %arg7: memref<128x128xbf16, #tpu.memory_space<vmem>>, %arg8: memref<1x128xf32, #tpu.memory_space<vmem>>, %arg9: memref<128x128xbf16, #tpu.memory_space<vmem>>, %arg10: memref<1x128xf32, #tpu.memory_space<vmem>>, %arg11: memref<8x128xf32, #tpu.memory_space<vmem>>, %arg12: memref<8x256xf32, #tpu.memory_space<vmem>>) attributes {dimension_semantics = [#tpu.dimension_semantics<parallel>, #tpu.dimension_semantics<arbitrary>], iteration_bounds = array<i64: 1, 1>, scalar_prefetch = 0 : i64, scratch_operands = 1 : i64, tpu.core_type = #tpu.core_type<tc>, window_params = [{transform_indices = @transform_0, window_bounds = array<i64: 8, 512>}, {transform_indices = @transform_1, window_bounds = array<i64: 512, 256>}, {pipeline_mode = #tpu.pipeline_mode<synchronous>, transform_indices = @transform_2, window_bounds = array<i64: 1, 256>}, {pipeline_mode = #tpu.pipeline_mode<synchronous>, transform_indices = @transform_3, window_bounds = array<i64: 256, 128>}, {pipeline_mode = #tpu.pipeline_mode<synchronous>, transform_indices = @transform_4, window_bounds = array<i64: 1, 128>}, {pipeline_mode = #tpu.pipeline_mode<synchronous>, transform_indices = @transform_5, window_bounds = array<i64: 128, 128>}, {pipeline_mode = #tpu.pipeline_mode<synchronous>, transform_indices = @transform_6, window_bounds = array<i64: 1, 128>}, {pipeline_mode = #tpu.pipeline_mode<synchronous>, transform_indices = @transform_7, window_bounds = array<i64: 128, 128>}, {pipeline_mode = #tpu.pipeline_mode<synchronous>, transform_indices = @transform_8, window_bounds = array<i64: 1, 128>}, {transform_indices = @transform_9, window_bounds = array<i64: 8, 128>}]} {
    %c0 = arith.constant 0 : index
    %c0_0 = arith.constant 0 : index
    %0 = vector.load %arg2[%c0, %c0_0] : memref<8x512xbf16, #tpu.memory_space<vmem>>, vector<8x512xbf16>
    %c0_1 = arith.constant 0 : index
    %c0_2 = arith.constant 0 : index
    %1 = vector.load %arg3[%c0_1, %c0_2] : memref<512x256xbf16, #tpu.memory_space<vmem>>, vector<512x256xbf16>
    %cst = arith.constant dense<0.000000e+00> : vector<8x256xf32>
    %2 = tpu.matmul %0, %1, %cst {dimension_numbers = #tpu.dot_dimension_numbers<[1], [0], [0], [1], [0, 0, 1, 1], [], []>} : vector<8x512xbf16>, vector<512x256xbf16>, vector<8x256xf32> -> vector<8x256xf32>
    %c0_3 = arith.constant 0 : index
    %c0_4 = arith.constant 0 : index
    %3 = vector.load %arg4[%c0_3, %c0_4] : memref<1x256xf32, #tpu.memory_space<vmem>>, vector<1x256xf32>
    %4 = vector.broadcast %3 : vector<1x256xf32> to vector<8x256xf32>
    %5 = arith.addf %2, %4 : vector<8x256xf32>
    %cst_5 = arith.constant 0.000000e+00 : f32
    %6 = vector.broadcast %cst_5 : f32 to vector<8x256xf32>
    %7 = arith.maximumf %5, %6 : vector<8x256xf32>
    %8 = arith.truncf %7 : vector<8x256xf32> to vector<8x256xbf16>
    %c0_6 = arith.constant 0 : index
    %c0_7 = arith.constant 0 : index
    %9 = vector.load %arg5[%c0_6, %c0_7] : memref<256x128xbf16, #tpu.memory_space<vmem>>, vector<256x128xbf16>
    %cst_8 = arith.constant dense<0.000000e+00> : vector<8x128xf32>
    %10 = tpu.matmul %8, %9, %cst_8 {dimension_numbers = #tpu.dot_dimension_numbers<[1], [0], [0], [1], [0, 0, 1, 1], [], []>} : vector<8x256xbf16>, vector<256x128xbf16>, vector<8x128xf32> -> vector<8x128xf32>
    %c0_9 = arith.constant 0 : index
    %c0_10 = arith.constant 0 : index
    %11 = vector.load %arg6[%c0_9, %c0_10] : memref<1x128xf32, #tpu.memory_space<vmem>>, vector<1x128xf32>
    %12 = vector.broadcast %11 : vector<1x128xf32> to vector<8x128xf32>
    %13 = arith.addf %10, %12 : vector<8x128xf32>
    %cst_11 = arith.constant 0.000000e+00 : f32
    %14 = vector.broadcast %cst_11 : f32 to vector<8x128xf32>
    %15 = arith.maximumf %13, %14 : vector<8x128xf32>
    %16 = arith.truncf %15 : vector<8x128xf32> to vector<8x128xbf16>
    %c0_12 = arith.constant 0 : index
    %c0_13 = arith.constant 0 : index
    %17 = vector.load %arg7[%c0_12, %c0_13] : memref<128x128xbf16, #tpu.memory_space<vmem>>, vector<128x128xbf16>
    %cst_14 = arith.constant dense<0.000000e+00> : vector<8x128xf32>
    %18 = tpu.matmul %16, %17, %cst_14 {dimension_numbers = #tpu.dot_dimension_numbers<[1], [0], [0], [1], [0, 0, 1, 1], [], []>} : vector<8x128xbf16>, vector<128x128xbf16>, vector<8x128xf32> -> vector<8x128xf32>
    %c0_15 = arith.constant 0 : index
    %c0_16 = arith.constant 0 : index
    %19 = vector.load %arg8[%c0_15, %c0_16] : memref<1x128xf32, #tpu.memory_space<vmem>>, vector<1x128xf32>
    %20 = vector.broadcast %19 : vector<1x128xf32> to vector<8x128xf32>
    %21 = arith.addf %18, %20 : vector<8x128xf32>
    %cst_17 = arith.constant 0.000000e+00 : f32
    %22 = vector.broadcast %cst_17 : f32 to vector<8x128xf32>
    %23 = arith.maximumf %21, %22 : vector<8x128xf32>
    %24 = arith.truncf %23 : vector<8x128xf32> to vector<8x128xbf16>
    %c0_18 = arith.constant 0 : index
    %c0_19 = arith.constant 0 : index
    %25 = vector.load %arg9[%c0_18, %c0_19] : memref<128x128xbf16, #tpu.memory_space<vmem>>, vector<128x128xbf16>
    %cst_20 = arith.constant dense<0.000000e+00> : vector<8x128xf32>
    %26 = tpu.matmul %24, %25, %cst_20 {dimension_numbers = #tpu.dot_dimension_numbers<[1], [0], [0], [1], [0, 0, 1, 1], [], []>} : vector<8x128xbf16>, vector<128x128xbf16>, vector<8x128xf32> -> vector<8x128xf32>
    %c0_21 = arith.constant 0 : index
    %c0_22 = arith.constant 0 : index
    %27 = vector.load %arg10[%c0_21, %c0_22] : memref<1x128xf32, #tpu.memory_space<vmem>>, vector<1x128xf32>
    %28 = vector.broadcast %27 : vector<1x128xf32> to vector<8x128xf32>
    %29 = arith.addf %26, %28 : vector<8x128xf32>
    %c0_23 = arith.constant 0 : index
    %c0_24 = arith.constant 0 : index
    %30 = vector.load %arg11[%c0_23, %c0_24] : memref<8x128xf32, #tpu.memory_space<vmem>>, vector<8x128xf32>
    tpu.vector_store %arg11[%c0_23, %c0_24], %29 {strides = array<i32>} : memref<8x128xf32, #tpu.memory_space<vmem>>, vector<8x128xf32>,
    return
  }
  func.func @transform_0(%arg0: i32, %arg1: i32) -> (i32, i32) {
    %c0_i32 = arith.constant 0 : i32
    return %arg0, %arg1 : i32, i32
  }
  func.func @transform_1(%arg0: i32, %arg1: i32) -> (i32, i32) {
    %c0_i32 = arith.constant 0 : i32
    %c0_i32_0 = arith.constant 0 : i32
    return %arg1, %c0_i32 : i32, i32
  }
  func.func @transform_2(%arg0: i32, %arg1: i32) -> (i32, i32) {
    %c0_i32 = arith.constant 0 : i32
    %c0_i32_0 = arith.constant 0 : i32
    %c0_i32_1 = arith.constant 0 : i32
    return %c0_i32, %c0_i32_0 : i32, i32
  }
  func.func @transform_3(%arg0: i32, %arg1: i32) -> (i32, i32) {
    %c0_i32 = arith.constant 0 : i32
    %c0_i32_0 = arith.constant 0 : i32
    %c0_i32_1 = arith.constant 0 : i32
    return %c0_i32, %c0_i32_0 : i32, i32
  }
  func.func @transform_4(%arg0: i32, %arg1: i32) -> (i32, i32) {
    %c0_i32 = arith.constant 0 : i32
    %c0_i32_0 = arith.constant 0 : i32
    %c0_i32_1 = arith.constant 0 : i32
    return %c0_i32, %c0_i32_0 : i32, i32
  }
  func.func @transform_5(%arg0: i32, %arg1: i32) -> (i32, i32) {
    %c0_i32 = arith.constant 0 : i32
    %c0_i32_0 = arith.constant 0 : i32
    %c0_i32_1 = arith.constant 0 : i32
    return %c0_i32, %c0_i32_0 : i32, i32
  }
  func.func @transform_6(%arg0: i32, %arg1: i32) -> (i32, i32) {
    %c0_i32 = arith.constant 0 : i32
    %c0_i32_0 = arith.constant 0 : i32
    %c0_i32_1 = arith.constant 0 : i32
    return %c0_i32, %c0_i32_0 : i32, i32
  }
  func.func @transform_7(%arg0: i32, %arg1: i32) -> (i32, i32) {
    %c0_i32 = arith.constant 0 : i32
    %c0_i32_0 = arith.constant 0 : i32
    %c0_i32_1 = arith.constant 0 : i32
    return %c0_i32, %c0_i32_0 : i32, i32
  }
  func.func @transform_8(%arg0: i32, %arg1: i32) -> (i32, i32) {
    %c0_i32 = arith.constant 0 : i32
    %c0_i32_0 = arith.constant 0 : i32
    %c0_i32_1 = arith.constant 0 : i32
    return %c0_i32, %c0_i32_0 : i32, i32
  }
  func.func @transform_9(%arg0: i32, %arg1: i32) -> (i32, i32) {
    %c0_i32 = arith.constant 0 : i32
    %c0_i32_0 = arith.constant 0 : i32
    return %arg0, %c0_i32 : i32, i32
  }
}

</mosaic_0001>

<llo_original>
// kernel: classifier_forward.1
$region0: #{classifier_forward.1}
  #allocation0 [shape = 'u32[]', space=smem, size = 0x4, offset = 0x4, fixed_abs, tag = 'smem constant byte address 0x4 - core index']
  #allocation1 [shape = 'u32[72,128]{1,0:T(1,128)}', space=vmem, size = 0x9000, scoped, tag = 'internal scratch']
  #allocation2 [shape = 'f32[8,256]{1,0:T(8,128)}', space=vmem, size = 0x2000, scoped, tag = 'scratch operand']
  %s0 = inlined_call_operand.vmem [shape: bf16[8,512], index: 0, kind: input, shape index: {}]
  %s1 = inlined_call_operand.vmem [shape: bf16[512,256], index: 1, kind: input, shape index: {}]
  %s2 = inlined_call_operand.vmem [shape: f32[1,256], index: 2, kind: input, shape index: {}]
  %s3 = inlined_call_operand.vmem [shape: bf16[256,128], index: 3, kind: input, shape index: {}]
  %s4 = inlined_call_operand.vmem [shape: f32[1,128], index: 4, kind: input, shape index: {}]
  %s5 = inlined_call_operand.vmem [shape: bf16[128,128], index: 5, kind: input, shape index: {}]
  %s6 = inlined_call_operand.vmem [shape: f32[1,128], index: 6, kind: input, shape index: {}]
  %s7 = inlined_call_operand.vmem [shape: bf16[128,128], index: 7, kind: input, shape index: {}]
  %s8 = inlined_call_operand.vmem [shape: f32[1,128], index: 8, kind: input, shape index: {}]
  %s9 = inlined_call_operand.vmem [shape: f32[8,128], index: 9, kind: output, shape index: {}]
  %s10 = sld [smem:[#allocation0]]
  $region46: #{classifier_forward.1} parent=0
    _
  %s12 = ssub.s32 1, %s10
  %s13 = scalar_select 0, %s12, %s10
  // Predicated region
  $region2: #{classifier_forward.1} parent=0 // pred_check
    _
  $region3: #{classifier_forward.1} parent=0 // pred_check_branch
    %15 = sbr.rel (0) target = $region5
  $region4: #{classifier_forward.1} parent=0 // pred_region
    _
  $region5: #{classifier_forward.1} parent=0 // pred_fallthru
    _
  // Predicated region
  $region6: #{classifier_forward.1} parent=0 // pred_check
    _
  $region7: #{classifier_forward.1} parent=0 // pred_check_branch
    %17 = sbr.rel (0) target = $region9
  $region8: #{classifier_forward.1} parent=0 // pred_region
    _
  $region9: #{classifier_forward.1} parent=0 // pred_fallthru
    _
  // Predicated region
  $region10: #{classifier_forward.1} parent=0 // pred_check
    _
  $region11: #{classifier_forward.1} parent=0 // pred_check_branch
    %19 = sbr.rel (0) target = $region13
  $region12: #{classifier_forward.1} parent=0 // pred_region
    _
  $region13: #{classifier_forward.1} parent=0 // pred_fallthru
    _
  // Predicated region
  $region14: #{classifier_forward.1} parent=0 // pred_check
    _
  $region15: #{classifier_forward.1} parent=0 // pred_check_branch
    %21 = sbr.rel (0) target = $region17
  $region16: #{classifier_forward.1} parent=0 // pred_region
    _
  $region17: #{classifier_forward.1} parent=0 // pred_fallthru
    _
  // Predicated region
  $region18: #{classifier_forward.1} parent=0 // pred_check
    _
  $region19: #{classifier_forward.1} parent=0 // pred_check_branch
    %23 = sbr.rel (0) target = $region21
  $region20: #{classifier_forward.1} parent=0 // pred_region
    _
  $region21: #{classifier_forward.1} parent=0 // pred_fallthru
    _
  // Predicated region
  $region22: #{classifier_forward.1} parent=0 // pred_check
    _
  $region23: #{classifier_forward.1} parent=0 // pred_check_branch
    %25 = sbr.rel (0) target = $region25
  $region24: #{classifier_forward.1} parent=0 // pred_region
    _
  $region25: #{classifier_forward.1} parent=0 // pred_fallthru
    _
  // Predicated region
  $region26: #{classifier_forward.1} parent=0 // pred_check
    _
  $region27: #{classifier_forward.1} parent=0 // pred_check_branch
    %27 = sbr.rel (0) target = $region29
  $region28: #{classifier_forward.1} parent=0 // pred_region
    _
  $region29: #{classifier_forward.1} parent=0 // pred_fallthru
    _
  // Predicated region
  $region30: #{classifier_forward.1} parent=0 // pred_check
    _
  $region31: #{classifier_forward.1} parent=0 // pred_check_branch
    %29 = sbr.rel (0) target = $region33
  $region32: #{classifier_forward.1} parent=0 // pred_region
    _
  $region33: #{classifier_forward.1} parent=0 // pred_fallthru
    _
  // Predicated region
  $region34: #{classifier_forward.1} parent=0 // pred_check
    _
  $region35: #{classifier_forward.1} parent=0 // pred_check_branch
    %31 = sbr.rel (0) target = $region37
  $region36: #{classifier_forward.1} parent=0 // pred_region
    _
  $region37: #{classifier_forward.1} parent=0 // pred_fallthru
    _
  %v32 = vld [vmem:[%s0] sm:$0xff]
  %v33 = vld [vmem:[%s0 + $0x8] sm:$0xff]
  %v34 = vld [vmem:[%s1] sm:$0xff]
  %v35 = vld [vmem:[%s1 + $0x8] sm:$0xff]
  %v36 = vld [vmem:[%s1 + $0x10] sm:$0xff]
  %v37 = vld [vmem:[%s1 + $0x18] sm:$0xff]
  %v38 = vld [vmem:[%s1 + $0x20] sm:$0xff]
  %v39 = vld [vmem:[%s1 + $0x28] sm:$0xff]
  %v40 = vld [vmem:[%s1 + $0x30] sm:$0xff]
  %v41 = vld [vmem:[%s1 + $0x38] sm:$0xff]
  %v42 = vld [vmem:[%s1 + $0x40] sm:$0xff]
  %v43 = vld [vmem:[%s1 + $0x48] sm:$0xff]
  %v44 = vld [vmem:[%s1 + $0x50] sm:$0xff]
  %v45 = vld [vmem:[%s1 + $0x58] sm:$0xff]
  %v46 = vld [vmem:[%s1 + $0x60] sm:$0xff]
  %v47 = vld [vmem:[%s1 + $0x68] sm:$0xff]
  %v48 = vld [vmem:[%s1 + $0x70] sm:$0xff]
  %v49 = vld [vmem:[%s1 + $0x78] sm:$0xff]
  %v50 = vld [vmem:[%s1 + $0x80] sm:$0xff]
  %v51 = vld [vmem:[%s1 + $0x88] sm:$0xff]
  %v52 = vld [vmem:[%s1 + $0x90] sm:$0xff]
  %v53 = vld [vmem:[%s1 + $0x98] sm:$0xff]
  %v54 = vld [vmem:[%s1 + $0xa0] sm:$0xff]
  %v55 = vld [vmem:[%s1 + $0xa8] sm:$0xff]
  %v56 = vld [vmem:[%s1 + $0xb0] sm:$0xff]
  %v57 = vld [vmem:[%s1 + $0xb8] sm:$0xff]
  %v58 = vld [vmem:[%s1 + $0xc0] sm:$0xff]
  %v59 = vld [vmem:[%s1 + $0xc8] sm:$0xff]
  %v60 = vld [vmem:[%s1 + $0xd0] sm:$0xff]
  %v61 = vld [vmem:[%s1 + $0xd8] sm:$0xff]
  %v62 = vld [vmem:[%s1 + $0xe0] sm:$0xff]
  %v63 = vld [vmem:[%s1 + $0xe8] sm:$0xff]
  %v64 = vld [vmem:[%s1 + $0xf0] sm:$0xff]
  %v65 = vld [vmem:[%s1 + $0xf8] sm:$0xff]
  %v66 = vld [vmem:[%s1 + $0x100] sm:$0xff]
  %v67 = vld [vmem:[%s1 + $0x108] sm:$0xff]
  %v68 = vld [vmem:[%s1 + $0x110] sm:$0xff]
  %v69 = vld [vmem:[%s1 + $0x118] sm:$0xff]
  %v70 = vld [vmem:[%s1 + $0x120] sm:$0xff]
  %v71 = vld [vmem:[%s1 + $0x128] sm:$0xff]
  %v72 = vld [vmem:[%s1 + $0x130] sm:$0xff]
  %v73 = vld [vmem:[%s1 + $0x138] sm:$0xff]
  %v74 = vld [vmem:[%s1 + $0x140] sm:$0xff]
  %v75 = vld [vmem:[%s1 + $0x148] sm:$0xff]
  %v76 = vld [vmem:[%s1 + $0x150] sm:$0xff]
  %v77 = vld [vmem:[%s1 + $0x158] sm:$0xff]
  %v78 = vld [vmem:[%s1 + $0x160] sm:$0xff]
  %v79 = vld [vmem:[%s1 + $0x168] sm:$0xff]
  %v80 = vld [vmem:[%s1 + $0x170] sm:$0xff]
  %v81 = vld [vmem:[%s1 + $0x178] sm:$0xff]
  %v82 = vld [vmem:[%s1 + $0x180] sm:$0xff]
  %v83 = vld [vmem:[%s1 + $0x188] sm:$0xff]
  %v84 = vld [vmem:[%s1 + $0x190] sm:$0xff]
  %v85 = vld [vmem:[%s1 + $0x198] sm:$0xff]
  %v86 = vld [vmem:[%s1 + $0x1a0] sm:$0xff]
  %v87 = vld [vmem:[%s1 + $0x1a8] sm:$0xff]
  %v88 = vld [vmem:[%s1 + $0x1b0] sm:$0xff]
  %v89 = vld [vmem:[%s1 + $0x1b8] sm:$0xff]
  %v90 = vld [vmem:[%s1 + $0x1c0] sm:$0xff]
  %v91 = vld [vmem:[%s1 + $0x1c8] sm:$0xff]
  %v92 = vld [vmem:[%s1 + $0x1d0] sm:$0xff]
  %v93 = vld [vmem:[%s1 + $0x1d8] sm:$0xff]
  %v94 = vld [vmem:[%s1 + $0x1e0] sm:$0xff]
  %v95 = vld [vmem:[%s1 + $0x1e8] sm:$0xff]
  %v96 = vld [vmem:[%s1 + $0x1f0] sm:$0xff]
  %v97 = vld [vmem:[%s1 + $0x1f8] sm:$0xff]
  %v98 = vld [vmem:[%s2] sm:$0x3]
  %v100 = vperm.slane %v98, 0
  %v101 = vperm.slane %v98, 1
  %v106 = vunpack.c.l.b16 %v32
  %v107 = vunpack.c.h.b16 %v32
  %v108 = vunpack.c.l.b16 %v33
  %v109 = vunpack.c.h.b16 %v33
  %v110 = vpack.c.b16 %v106, %v106
  %v111 = vpack.c.b16 %v107, %v107
  %v112 = vpack.c.b16 %v108, %v108
  %v113 = vpack.c.b16 %v109, %v109
  %v182 = vunpack.c.l.b16 %v34
  %v183 = vunpack.c.h.b16 %v34
  %v184 = vunpack.c.l.b16 %v35
  %v185 = vunpack.c.h.b16 %v35
  %v186 = vunpack.c.l.b16 %v36
  %v187 = vunpack.c.h.b16 %v36
  %v188 = vunpack.c.l.b16 %v37
  %v189 = vunpack.c.h.b16 %v37
  %v190 = vunpack.c.l.b16 %v38
  %v191 = vunpack.c.h.b16 %v38
  %v192 = vunpack.c.l.b16 %v39
  %v193 = vunpack.c.h.b16 %v39
  %v194 = vunpack.c.l.b16 %v40
  %v195 = vunpack.c.h.b16 %v40
  %v196 = vunpack.c.l.b16 %v41
  %v197 = vunpack.c.h.b16 %v41
  %v198 = vunpack.c.l.b16 %v42
  %v199 = vunpack.c.h.b16 %v42
  %v200 = vunpack.c.l.b16 %v43
  %v201 = vunpack.c.h.b16 %v43
  %v202 = vunpack.c.l.b16 %v44
  %v203 = vunpack.c.h.b16 %v44
  %v204 = vunpack.c.l.b16 %v45
  %v205 = vunpack.c.h.b16 %v45
  %v206 = vunpack.c.l.b16 %v46
  %v207 = vunpack.c.h.b16 %v46
  %v208 = vunpack.c.l.b16 %v47
  %v209 = vunpack.c.h.b16 %v47
  %v210 = vunpack.c.l.b16 %v48
  %v211 = vunpack.c.h.b16 %v48
  %v212 = vunpack.c.l.b16 %v49
  %v213 = vunpack.c.h.b16 %v49
  %v214 = vunpack.c.l.b16 %v50
  %v215 = vunpack.c.h.b16 %v50
  %v216 = vunpack.c.l.b16 %v51
  %v217 = vunpack.c.h.b16 %v51
  %v218 = vunpack.c.l.b16 %v52
  %v219 = vunpack.c.h.b16 %v52
  %v220 = vunpack.c.l.b16 %v53
  %v221 = vunpack.c.h.b16 %v53
  %v222 = vunpack.c.l.b16 %v54
  %v223 = vunpack.c.h.b16 %v54
  %v224 = vunpack.c.l.b16 %v55
  %v225 = vunpack.c.h.b16 %v55
  %v226 = vunpack.c.l.b16 %v56
  %v227 = vunpack.c.h.b16 %v56
  %v228 = vunpack.c.l.b16 %v57
  %v229 = vunpack.c.h.b16 %v57
  %v230 = vunpack.c.l.b16 %v58
  %v231 = vunpack.c.h.b16 %v58
  %v232 = vunpack.c.l.b16 %v59
  %v233 = vunpack.c.h.b16 %v59
  %v234 = vunpack.c.l.b16 %v60
  %v235 = vunpack.c.h.b16 %v60
  %v236 = vunpack.c.l.b16 %v61
  %v237 = vunpack.c.h.b16 %v61
  %v238 = vunpack.c.l.b16 %v62
  %v239 = vunpack.c.h.b16 %v62
  %v240 = vunpack.c.l.b16 %v63
  %v241 = vunpack.c.h.b16 %v63
  %v242 = vunpack.c.l.b16 %v64
  %v243 = vunpack.c.h.b16 %v64
  %v244 = vunpack.c.l.b16 %v65
  %v245 = vunpack.c.h.b16 %v65
  %v246 = vunpack.c.l.b16 %v66
  %v247 = vunpack.c.h.b16 %v66
  %v248 = vunpack.c.l.b16 %v67
  %v249 = vunpack.c.h.b16 %v67
  %v250 = vunpack.c.l.b16 %v68
  %v251 = vunpack.c.h.b16 %v68
  %v252 = vunpack.c.l.b16 %v69
  %v253 = vunpack.c.h.b16 %v69
  %v254 = vunpack.c.l.b16 %v70
  %v255 = vunpack.c.h.b16 %v70
  %v256 = vunpack.c.l.b16 %v71
  %v257 = vunpack.c.h.b16 %v71
  %v258 = vunpack.c.l.b16 %v72
  %v259 = vunpack.c.h.b16 %v72
  %v260 = vunpack.c.l.b16 %v73
  %v261 = vunpack.c.h.b16 %v73
  %v262 = vunpack.c.l.b16 %v74
  %v263 = vunpack.c.h.b16 %v74
  %v264 = vunpack.c.l.b16 %v75
  %v265 = vunpack.c.h.b16 %v75
  %v266 = vunpack.c.l.b16 %v76
  %v267 = vunpack.c.h.b16 %v76
  %v268 = vunpack.c.l.b16 %v77
  %v269 = vunpack.c.h.b16 %v77
  %v270 = vunpack.c.l.b16 %v78
  %v271 = vunpack.c.h.b16 %v78
  %v272 = vunpack.c.l.b16 %v79
  %v273 = vunpack.c.h.b16 %v79
  %v274 = vunpack.c.l.b16 %v80
  %v275 = vunpack.c.h.b16 %v80
  %v276 = vunpack.c.l.b16 %v81
  %v277 = vunpack.c.h.b16 %v81
  %v278 = vunpack.c.l.b16 %v82
  %v279 = vunpack.c.h.b16 %v82
  %v280 = vunpack.c.l.b16 %v83
  %v281 = vunpack.c.h.b16 %v83
  %v282 = vunpack.c.l.b16 %v84
  %v283 = vunpack.c.h.b16 %v84
  %v284 = vunpack.c.l.b16 %v85
  %v285 = vunpack.c.h.b16 %v85
  %v286 = vunpack.c.l.b16 %v86
  %v287 = vunpack.c.h.b16 %v86
  %v288 = vunpack.c.l.b16 %v87
  %v289 = vunpack.c.h.b16 %v87
  %v290 = vunpack.c.l.b16 %v88
  %v291 = vunpack.c.h.b16 %v88
  %v292 = vunpack.c.l.b16 %v89
  %v293 = vunpack.c.h.b16 %v89
  %v294 = vunpack.c.l.b16 %v90
  %v295 = vunpack.c.h.b16 %v90
  %v296 = vunpack.c.l.b16 %v91
  %v297 = vunpack.c.h.b16 %v91
  %v298 = vunpack.c.l.b16 %v92
  %v299 = vunpack.c.h.b16 %v92
  %v300 = vunpack.c.l.b16 %v93
  %v301 = vunpack.c.h.b16 %v93
  %v302 = vunpack.c.l.b16 %v94
  %v303 = vunpack.c.h.b16 %v94
  %v304 = vunpack.c.l.b16 %v95
  %v305 = vunpack.c.h.b16 %v95
  %v306 = vunpack.c.l.b16 %v96
  %v307 = vunpack.c.h.b16 %v96
  %v308 = vunpack.c.l.b16 %v97
  %v309 = vunpack.c.h.b16 %v97
  %v310 = vpack.c.b16 %v184, %v182
  %v311 = vpack.c.b16 %v185, %v183
  %v312 = vpack.c.b16 %v188, %v186
  %v313 = vpack.c.b16 %v189, %v187
  %v314 = vpack.c.b16 %v192, %v190
  %v315 = vpack.c.b16 %v193, %v191
  %v316 = vpack.c.b16 %v196, %v194
  %v317 = vpack.c.b16 %v197, %v195
  %v318 = vpack.c.b16 %v200, %v198
  %v319 = vpack.c.b16 %v201, %v199
  %v320 = vpack.c.b16 %v204, %v202
  %v321 = vpack.c.b16 %v205, %v203
  %v322 = vpack.c.b16 %v208, %v206
  %v323 = vpack.c.b16 %v209, %v207
  %v324 = vpack.c.b16 %v212, %v210
  %v325 = vpack.c.b16 %v213, %v211
  %v326 = vpack.c.b16 %v216, %v214
  %v327 = vpack.c.b16 %v217, %v215
  %v328 = vpack.c.b16 %v220, %v218
  %v329 = vpack.c.b16 %v221, %v219
  %v330 = vpack.c.b16 %v224, %v222
  %v331 = vpack.c.b16 %v225, %v223
  %v332 = vpack.c.b16 %v228, %v226
  %v333 = vpack.c.b16 %v229, %v227
  %v334 = vpack.c.b16 %v232, %v230
  %v335 = vpack.c.b16 %v233, %v231
  %v336 = vpack.c.b16 %v236, %v234
  %v337 = vpack.c.b16 %v237, %v235
  %v338 = vpack.c.b16 %v240, %v238
  %v339 = vpack.c.b16 %v241, %v239
  %v340 = vpack.c.b16 %v244, %v242
  %v341 = vpack.c.b16 %v245, %v243
  %v342 = vpack.c.b16 %v248, %v246
  %v343 = vpack.c.b16 %v249, %v247
  %v344 = vpack.c.b16 %v252, %v250
  %v345 = vpack.c.b16 %v253, %v251
  %v346 = vpack.c.b16 %v256, %v254
  %v347 = vpack.c.b16 %v257, %v255
  %v348 = vpack.c.b16 %v260, %v258
  %v349 = vpack.c.b16 %v261, %v259
  %v350 = vpack.c.b16 %v264, %v262
  %v351 = vpack.c.b16 %v265, %v263
  %v352 = vpack.c.b16 %v268, %v266
  %v353 = vpack.c.b16 %v269, %v267
  %v354 = vpack.c.b16 %v272, %v270
  %v355 = vpack.c.b16 %v273, %v271
  %v356 = vpack.c.b16 %v276, %v274
  %v357 = vpack.c.b16 %v277, %v275
  %v358 = vpack.c.b16 %v280, %v278
  %v359 = vpack.c.b16 %v281, %v279
  %v360 = vpack.c.b16 %v284, %v282
  %v361 = vpack.c.b16 %v285, %v283
  %v362 = vpack.c.b16 %v288, %v286
  %v363 = vpack.c.b16 %v289, %v287
  %v364 = vpack.c.b16 %v292, %v290
  %v365 = vpack.c.b16 %v293, %v291
  %v366 = vpack.c.b16 %v296, %v294
  %v367 = vpack.c.b16 %v297, %v295
  %v368 = vpack.c.b16 %v300, %v298
  %v369 = vpack.c.b16 %v301, %v299
  %v370 = vpack.c.b16 %v304, %v302
  %v371 = vpack.c.b16 %v305, %v303
  %v372 = vpack.c.b16 %v308, %v306
  %v373 = vpack.c.b16 %v309, %v307
  %438 = vmatpush.bf16.msra.mxu0 %v324
  %439 = vmatpush.bf16.msra.mxu0 %v322
  %440 = vmatpush.bf16.msra.mxu0 %v320
  %441 = vmatpush.bf16.msra.mxu0 %v318
  %442 = vmatpush.bf16.msra.mxu0 %v316
  %443 = vmatpush.bf16.msra.mxu0 %v314
  %444 = vmatpush.bf16.msra.mxu0 %v312
  %445 = vmatpush.bf16.msra.mxu0 %v310
  %446 = vmatmul.bf16.gmra.mxu0 %v110
  %v447 = vpop.f32.mrf.mxu0
  %v448 = vadd.f32 %v100, %v447
  %v449 = vpop.f32.mrf.mxu0
  %450 = vdwg.mxu0
  %451 = vmatpush.bf16.msra.mxu0 %v340
  %452 = vmatpush.bf16.msra.mxu0 %v338
  %453 = vmatpush.bf16.msra.mxu0 %v336
  %454 = vmatpush.bf16.msra.mxu0 %v334
  %455 = vmatpush.bf16.msra.mxu0 %v332
  %456 = vmatpush.bf16.msra.mxu0 %v330
  %457 = vmatpush.bf16.msra.mxu0 %v328
  %458 = vmatpush.bf16.msra.mxu0 %v326
  %459 = vmatmul.bf16.gmra.mxu0 %v111
  %v460 = vpop.f32.mrf.mxu0
  %v461 = vadd.f32 %v448, %v460
  %v462 = vpop.f32.mrf.mxu0
  %463 = vdwg.mxu0
  %464 = vmatpush.bf16.msra.mxu0 %v356
  %465 = vmatpush.bf16.msra.mxu0 %v354
  %466 = vmatpush.bf16.msra.mxu0 %v352
  %467 = vmatpush.bf16.msra.mxu0 %v350
  %468 = vmatpush.bf16.msra.mxu0 %v348
  %469 = vmatpush.bf16.msra.mxu0 %v346
  %470 = vmatpush.bf16.msra.mxu0 %v344
  %471 = vmatpush.bf16.msra.mxu0 %v342
  %472 = vmatmul.bf16.gmra.mxu0 %v112
  %v473 = vpop.f32.mrf.mxu0
  %v474 = vadd.f32 %v461, %v473
  %v475 = vpop.f32.mrf.mxu0
  %476 = vdwg.mxu0
  %477 = vmatpush.bf16.msra.mxu0 %v372
  %478 = vmatpush.bf16.msra.mxu0 %v370
  %479 = vmatpush.bf16.msra.mxu0 %v368
  %480 = vmatpush.bf16.msra.mxu0 %v366
  %481 = vmatpush.bf16.msra.mxu0 %v364
  %482 = vmatpush.bf16.msra.mxu0 %v362
  %483 = vmatpush.bf16.msra.mxu0 %v360
  %484 = vmatpush.bf16.msra.mxu0 %v358
  %485 = vmatmul.bf16.gmra.mxu0 %v113
  %v486 = vpop.f32.mrf.mxu0
  %v487 = vadd.f32 %v474, %v486
  %v488 = vpop.f32.mrf.mxu0
  %489 = vdwg.mxu0
  %490 = vmatpush.bf16.msra.mxu0 %v325
  %491 = vmatpush.bf16.msra.mxu0 %v323
  %492 = vmatpush.bf16.msra.mxu0 %v321
  %493 = vmatpush.bf16.msra.mxu0 %v319
  %494 = vmatpush.bf16.msra.mxu0 %v317
  %495 = vmatpush.bf16.msra.mxu0 %v315
  %496 = vmatpush.bf16.msra.mxu0 %v313
  %497 = vmatpush.bf16.msra.mxu0 %v311
  %498 = vmatmul.bf16.gmra.mxu0 %v110
  %v499 = vpop.f32.mrf.mxu0
  %v500 = vadd.f32 %v101, %v499
  %v501 = vpop.f32.mrf.mxu0
  %502 = vdwg.mxu0
  %503 = vmatpush.bf16.msra.mxu0 %v341
  %504 = vmatpush.bf16.msra.mxu0 %v339
  %505 = vmatpush.bf16.msra.mxu0 %v337
  %506 = vmatpush.bf16.msra.mxu0 %v335
  %507 = vmatpush.bf16.msra.mxu0 %v333
  %508 = vmatpush.bf16.msra.mxu0 %v331
  %509 = vmatpush.bf16.msra.mxu0 %v329
  %510 = vmatpush.bf16.msra.mxu0 %v327
  %511 = vmatmul.bf16.gmra.mxu0 %v111
  %v512 = vpop.f32.mrf.mxu0
  %v513 = vadd.f32 %v500, %v512
  %v514 = vpop.f32.mrf.mxu0
  %515 = vdwg.mxu0
  %516 = vmatpush.bf16.msra.mxu0 %v357
  %517 = vmatpush.bf16.msra.mxu0 %v355
  %518 = vmatpush.bf16.msra.mxu0 %v353
  %519 = vmatpush.bf16.msra.mxu0 %v351
  %520 = vmatpush.bf16.msra.mxu0 %v349
  %521 = vmatpush.bf16.msra.mxu0 %v347
  %522 = vmatpush.bf16.msra.mxu0 %v345
  %523 = vmatpush.bf16.msra.mxu0 %v343
  %524 = vmatmul.bf16.gmra.mxu0 %v112
  %v525 = vpop.f32.mrf.mxu0
  %v526 = vadd.f32 %v513, %v525
  %v527 = vpop.f32.mrf.mxu0
  %528 = vdwg.mxu0
  %529 = vmatpush.bf16.msra.mxu0 %v373
  %530 = vmatpush.bf16.msra.mxu0 %v371
  %531 = vmatpush.bf16.msra.mxu0 %v369
  %532 = vmatpush.bf16.msra.mxu0 %v367
  %533 = vmatpush.bf16.msra.mxu0 %v365
  %534 = vmatpush.bf16.msra.mxu0 %v363
  %535 = vmatpush.bf16.msra.mxu0 %v361
  %536 = vmatpush.bf16.msra.mxu0 %v359
  %537 = vmatmul.bf16.gmra.mxu0 %v113
  %v538 = vpop.f32.mrf.mxu0
  %v539 = vadd.f32 %v526, %v538
  %v540 = vpop.f32.mrf.mxu0
  %541 = vdwg.mxu0
  %v542 = vmax.f32 %v487, 0.0
  %v543 = vmax.f32 %v539, 0.0
  %v544 = vpack.c.bf16 %v542, %v542
  %v545 = vpack.c.bf16 %v543, %v543
  %v546 = vld [vmem:[%s3] sm:$0xf]
  %v547 = vld [vmem:[%s3 + $0x4] sm:$0xf]
  %v548 = vld [vmem:[%s3 + $0x8] sm:$0xf]
  %v549 = vld [vmem:[%s3 + $0xc] sm:$0xf]
  %v550 = vld [vmem:[%s3 + $0x10] sm:$0xf]
  %v551 = vld [vmem:[%s3 + $0x14] sm:$0xf]
  %v552 = vld [vmem:[%s3 + $0x18] sm:$0xf]
  %v553 = vld [vmem:[%s3 + $0x1c] sm:$0xf]
  %v554 = vld [vmem:[%s3 + $0x20] sm:$0xf]
  %v555 = vld [vmem:[%s3 + $0x24] sm:$0xf]
  %v556 = vld [vmem:[%s3 + $0x28] sm:$0xf]
  %v557 = vld [vmem:[%s3 + $0x2c] sm:$0xf]
  %v558 = vld [vmem:[%s3 + $0x30] sm:$0xf]
  %v559 = vld [vmem:[%s3 + $0x34] sm:$0xf]
  %v560 = vld [vmem:[%s3 + $0x38] sm:$0xf]
  %v561 = vld [vmem:[%s3 + $0x3c] sm:$0xf]
  %v562 = vld [vmem:[%s3 + $0x40] sm:$0xf]
  %v563 = vld [vmem:[%s3 + $0x44] sm:$0xf]
  %v564 = vld [vmem:[%s3 + $0x48] sm:$0xf]
  %v565 = vld [vmem:[%s3 + $0x4c] sm:$0xf]
  %v566 = vld [vmem:[%s3 + $0x50] sm:$0xf]
  %v567 = vld [vmem:[%s3 + $0x54] sm:$0xf]
  %v568 = vld [vmem:[%s3 + $0x58] sm:$0xf]
  %v569 = vld [vmem:[%s3 + $0x5c] sm:$0xf]
  %v570 = vld [vmem:[%s3 + $0x60] sm:$0xf]
  %v571 = vld [vmem:[%s3 + $0x64] sm:$0xf]
  %v572 = vld [vmem:[%s3 + $0x68] sm:$0xf]
  %v573 = vld [vmem:[%s3 + $0x6c] sm:$0xf]
  %v574 = vld [vmem:[%s3 + $0x70] sm:$0xf]
  %v575 = vld [vmem:[%s3 + $0x74] sm:$0xf]
  %v576 = vld [vmem:[%s3 + $0x78] sm:$0xf]
  %v577 = vld [vmem:[%s3 + $0x7c] sm:$0xf]
  %v578 = vld [vmem:[%s4] sm:$0x1]
  %v580 = vperm.slane %v578, 0
  %v614 = vunpack.c.l.b16 %v546
  %v615 = vunpack.c.l.b16 %v547
  %v616 = vunpack.c.l.b16 %v548
  %v617 = vunpack.c.l.b16 %v549
  %v618 = vunpack.c.l.b16 %v550
  %v619 = vunpack.c.l.b16 %v551
  %v620 = vunpack.c.l.b16 %v552
  %v621 = vunpack.c.l.b16 %v553
  %v622 = vunpack.c.l.b16 %v554
  %v623 = vunpack.c.l.b16 %v555
  %v624 = vunpack.c.l.b16 %v556
  %v625 = vunpack.c.l.b16 %v557
  %v626 = vunpack.c.l.b16 %v558
  %v627 = vunpack.c.l.b16 %v559
  %v628 = vunpack.c.l.b16 %v560
  %v629 = vunpack.c.l.b16 %v561
  %v630 = vunpack.c.l.b16 %v562
  %v631 = vunpack.c.l.b16 %v563
  %v632 = vunpack.c.l.b16 %v564
  %v633 = vunpack.c.l.b16 %v565
  %v634 = vunpack.c.l.b16 %v566
  %v635 = vunpack.c.l.b16 %v567
  %v636 = vunpack.c.l.b16 %v568
  %v637 = vunpack.c.l.b16 %v569
  %v638 = vunpack.c.l.b16 %v570
  %v639 = vunpack.c.l.b16 %v571
  %v640 = vunpack.c.l.b16 %v572
  %v641 = vunpack.c.l.b16 %v573
  %v642 = vunpack.c.l.b16 %v574
  %v643 = vunpack.c.l.b16 %v575
  %v644 = vunpack.c.l.b16 %v576
  %v645 = vunpack.c.l.b16 %v577
  %v646 = vpack.c.b16 %v615, %v614
  %v647 = vpack.c.b16 %v617, %v616
  %v648 = vpack.c.b16 %v619, %v618
  %v649 = vpack.c.b16 %v621, %v620
  %v650 = vpack.c.b16 %v623, %v622
  %v651 = vpack.c.b16 %v625, %v624
  %v652 = vpack.c.b16 %v627, %v626
  %v653 = vpack.c.b16 %v629, %v628
  %v654 = vpack.c.b16 %v631, %v630
  %v655 = vpack.c.b16 %v633, %v632
  %v656 = vpack.c.b16 %v635, %v634
  %v657 = vpack.c.b16 %v637, %v636
  %v658 = vpack.c.b16 %v639, %v638
  %v659 = vpack.c.b16 %v641, %v640
  %v660 = vpack.c.b16 %v643, %v642
  %v661 = vpack.c.b16 %v645, %v644
  %678 = vmatpush.bf16.msra.mxu0 %v653
  %679 = vmatpush.bf16.msra.mxu0 %v652
  %680 = vmatpush.bf16.msra.mxu0 %v651
  %681 = vmatpush.bf16.msra.mxu0 %v650
  %682 = vmatpush.bf16.msra.mxu0 %v649
  %683 = vmatpush.bf16.msra.mxu0 %v648
  %684 = vmatpush.bf16.msra.mxu0 %v647
  %685 = vmatpush.bf16.msra.mxu0 %v646
  %686 = vmatmul.bf16.gmra.mxu0 %v544
  %v687 = vpop.f32.mrf.mxu0
  %v688 = vadd.f32 %v580, %v687
  %v689 = vpop.f32.mrf.mxu0
  %690 = vdwg.mxu0
  %691 = vmatpush.bf16.msra.mxu0 %v661
  %692 = vmatpush.bf16.msra.mxu0 %v660
  %693 = vmatpush.bf16.msra.mxu0 %v659
  %694 = vmatpush.bf16.msra.mxu0 %v658
  %695 = vmatpush.bf16.msra.mxu0 %v657
  %696 = vmatpush.bf16.msra.mxu0 %v656
  %697 = vmatpush.bf16.msra.mxu0 %v655
  %698 = vmatpush.bf16.msra.mxu0 %v654
  %699 = vmatmul.bf16.gmra.mxu0 %v545
  %v700 = vpop.f32.mrf.mxu0
  %v701 = vadd.f32 %v688, %v700
  %v702 = vpop.f32.mrf.mxu0
  %703 = vdwg.mxu0
  %v704 = vmax.f32 %v701, 0.0
  %v705 = vpack.c.bf16 %v704, %v704
  %v706 = vld [vmem:[%s5] sm:$0xf]
  %v707 = vld [vmem:[%s5 + $0x4] sm:$0xf]
  %v708 = vld [vmem:[%s5 + $0x8] sm:$0xf]
  %v709 = vld [vmem:[%s5 + $0xc] sm:$0xf]
  %v710 = vld [vmem:[%s5 + $0x10] sm:$0xf]
  %v711 = vld [vmem:[%s5 + $0x14] sm:$0xf]
  %v712 = vld [vmem:[%s5 + $0x18] sm:$0xf]
  %v713 = vld [vmem:[%s5 + $0x1c] sm:$0xf]
  %v714 = vld [vmem:[%s5 + $0x20] sm:$0xf]
  %v715 = vld [vmem:[%s5 + $0x24] sm:$0xf]
  %v716 = vld [vmem:[%s5 + $0x28] sm:$0xf]
  %v717 = vld [vmem:[%s5 + $0x2c] sm:$0xf]
  %v718 = vld [vmem:[%s5 + $0x30] sm:$0xf]
  %v719 = vld [vmem:[%s5 + $0x34] sm:$0xf]
  %v720 = vld [vmem:[%s5 + $0x38] sm:$0xf]
  %v721 = vld [vmem:[%s5 + $0x3c] sm:$0xf]
  %v722 = vld [vmem:[%s6] sm:$0x1]
  %v724 = vperm.slane %v722, 0
  %v742 = vunpack.c.l.b16 %v706
  %v743 = vunpack.c.l.b16 %v707
  %v744 = vunpack.c.l.b16 %v708
  %v745 = vunpack.c.l.b16 %v709
  %v746 = vunpack.c.l.b16 %v710
  %v747 = vunpack.c.l.b16 %v711
  %v748 = vunpack.c.l.b16 %v712
  %v749 = vunpack.c.l.b16 %v713
  %v750 = vunpack.c.l.b16 %v714
  %v751 = vunpack.c.l.b16 %v715
  %v752 = vunpack.c.l.b16 %v716
  %v753 = vunpack.c.l.b16 %v717
  %v754 = vunpack.c.l.b16 %v718
  %v755 = vunpack.c.l.b16 %v719
  %v756 = vunpack.c.l.b16 %v720
  %v757 = vunpack.c.l.b16 %v721
  %v758 = vpack.c.b16 %v743, %v742
  %v759 = vpack.c.b16 %v745, %v744
  %v760 = vpack.c.b16 %v747, %v746
  %v761 = vpack.c.b16 %v749, %v748
  %v762 = vpack.c.b16 %v751, %v750
  %v763 = vpack.c.b16 %v753, %v752
  %v764 = vpack.c.b16 %v755, %v754
  %v765 = vpack.c.b16 %v757, %v756
  %774 = vmatpush.bf16.msra.mxu0 %v765
  %775 = vmatpush.bf16.msra.mxu0 %v764
  %776 = vmatpush.bf16.msra.mxu0 %v763
  %777 = vmatpush.bf16.msra.mxu0 %v762
  %778 = vmatpush.bf16.msra.mxu0 %v761
  %779 = vmatpush.bf16.msra.mxu0 %v760
  %780 = vmatpush.bf16.msra.mxu0 %v759
  %781 = vmatpush.bf16.msra.mxu0 %v758
  %782 = vmatmul.bf16.gmra.mxu0 %v705
  %v783 = vpop.f32.mrf.mxu0
  %v784 = vadd.f32 %v724, %v783
  %v785 = vpop.f32.mrf.mxu0
  %786 = vdwg.mxu0
  %v787 = vmax.f32 %v784, 0.0
  %v788 = vpack.c.bf16 %v787, %v787
  %v789 = vld [vmem:[%s7] sm:$0xf]
  %v790 = vld [vmem:[%s7 + $0x4] sm:$0xf]
  %v791 = vld [vmem:[%s7 + $0x8] sm:$0xf]
  %v792 = vld [vmem:[%s7 + $0xc] sm:$0xf]
  %v793 = vld [vmem:[%s7 + $0x10] sm:$0xf]
  %v794 = vld [vmem:[%s7 + $0x14] sm:$0xf]
  %v795 = vld [vmem:[%s7 + $0x18] sm:$0xf]
  %v796 = vld [vmem:[%s7 + $0x1c] sm:$0xf]
  %v797 = vld [vmem:[%s7 + $0x20] sm:$0xf]
  %v798 = vld [vmem:[%s7 + $0x24] sm:$0xf]
  %v799 = vld [vmem:[%s7 + $0x28] sm:$0xf]
  %v800 = vld [vmem:[%s7 + $0x2c] sm:$0xf]
  %v801 = vld [vmem:[%s7 + $0x30] sm:$0xf]
  %v802 = vld [vmem:[%s7 + $0x34] sm:$0xf]
  %v803 = vld [vmem:[%s7 + $0x38] sm:$0xf]
  %v804 = vld [vmem:[%s7 + $0x3c] sm:$0xf]
  %v805 = vld [vmem:[%s8] sm:$0x1]
  %v807 = vperm.slane %v805, 0
  %v825 = vunpack.c.l.b16 %v789
  %v826 = vunpack.c.l.b16 %v790
  %v827 = vunpack.c.l.b16 %v791
  %v828 = vunpack.c.l.b16 %v792
  %v829 = vunpack.c.l.b16 %v793
  %v830 = vunpack.c.l.b16 %v794
  %v831 = vunpack.c.l.b16 %v795
  %v832 = vunpack.c.l.b16 %v796
  %v833 = vunpack.c.l.b16 %v797
  %v834 = vunpack.c.l.b16 %v798
  %v835 = vunpack.c.l.b16 %v799
  %v836 = vunpack.c.l.b16 %v800
  %v837 = vunpack.c.l.b16 %v801
  %v838 = vunpack.c.l.b16 %v802
  %v839 = vunpack.c.l.b16 %v803
  %v840 = vunpack.c.l.b16 %v804
  %v841 = vpack.c.b16 %v826, %v825
  %v842 = vpack.c.b16 %v828, %v827
  %v843 = vpack.c.b16 %v830, %v829
  %v844 = vpack.c.b16 %v832, %v831
  %v845 = vpack.c.b16 %v834, %v833
  %v846 = vpack.c.b16 %v836, %v835
  %v847 = vpack.c.b16 %v838, %v837
  %v848 = vpack.c.b16 %v840, %v839
  %857 = vmatpush.bf16.msra.mxu0 %v848
  %858 = vmatpush.bf16.msra.mxu0 %v847
  %859 = vmatpush.bf16.msra.mxu0 %v846
  %860 = vmatpush.bf16.msra.mxu0 %v845
  %861 = vmatpush.bf16.msra.mxu0 %v844
  %862 = vmatpush.bf16.msra.mxu0 %v843
  %863 = vmatpush.bf16.msra.mxu0 %v842
  %864 = vmatpush.bf16.msra.mxu0 %v841
  %865 = vmatmul.bf16.gmra.mxu0 %v788
  %v866 = vpop.f32.mrf.mxu0
  %v867 = vadd.f32 %v807, %v866
  %v868 = vpop.f32.mrf.mxu0
  %869 = vdwg.mxu0
  %870 = vst [vmem:[%s9] sm:$0xff] %v867
  // Predicated region
  $region38: #{classifier_forward.1} parent=0 // pred_check
    _
  $region39: #{classifier_forward.1} parent=0 // pred_check_branch
    %872 = sbr.rel (0) target = $region41
  $region40: #{classifier_forward.1} parent=0 // pred_region
    _
  $region41: #{classifier_forward.1} parent=0 // pred_fallthru
    _
  // Predicated region
  $region42: #{classifier_forward.1} parent=0 // pred_check
    _
  $region43: #{classifier_forward.1} parent=0 // pred_check_branch
    %874 = sbr.rel (0) target = $region45
  $region44: #{classifier_forward.1} parent=0 // pred_region
    _
  $region45: #{classifier_forward.1} parent=0 // pred_fallthru
    _

</llo_original>
